<compile_context>
chip_gen: v6e
topology: v6e:2x2x1
jax: 0.10.0
libtpu: 0.0.40
codegen_flags: <defaults>
</compile_context>

<pallas_src>
import functools

import jax
import jax.numpy as jnp
from jax.experimental import pallas as pl
from jax.experimental.pallas import tpu as pltpu

_LANE = 128


def _round_up(n, m):
    return ((n + m - 1) // m) * m


def _sublane(dtype):
    """Sublane packing granularity: 8 (f32), 16 (bf16), 32 (int8/fp8)."""
    return max(8, 32 // jnp.dtype(dtype).itemsize)


def _vmem_limit_bytes(est_bytes):
    """Scoped-VMEM request: 2x working-set estimate, floored at 32 MiB (v5e's
    default is only 16 MiB) and capped at 60 MiB (below v7x's 64 MiB)."""
    return int(min(60 * 2**20, max(32 * 2**20, 2 * int(est_bytes))))


# ---------------------- Fused LayerNorm + Linear kernel ----------------------

def _norm_matmul_kernel(x_ref, w_ref, bias_ref, o_ref, y_ref, *, eps):
    # Normalize the row tile once per row-block (j == 0), cache it in VMEM in
    # the MXU input dtype; every Dout tile j reuses it without recompute.
    @pl.when(pl.program_id(1) == 0)
    def _():
        x = x_ref[...].astype(jnp.float32)
        mean = jnp.mean(x, axis=-1, keepdims=True)
        xc = x - mean
        var = jnp.mean(xc * xc, axis=-1, keepdims=True)
        y_ref[...] = (xc * jax.lax.rsqrt(var + eps)).astype(y_ref.dtype)

    # MXU matmul: bf16 weights -> bf16 x bf16 inputs, f32 accumulation.
    acc = jnp.dot(y_ref[...], w_ref[...], preferred_element_type=jnp.float32)
    acc = acc + bias_ref[...].astype(jnp.float32)
    o_ref[...] = acc.astype(o_ref.dtype)


def prenorm_linear_pallas(x, w, bias, *, eps=1e-5, block_rows=512,
                          block_cols=512):
    """Fused Linear(LayerNorm(x)).

    x: (..., D); w: (D, Dout); bias: (Dout,).
    LayerNorm's gamma/beta must already be folded into (w, bias) — see
    PreNormPallas._fold().
    """
    *lead, D = x.shape
    Dout = w.shape[1]
    x2 = x.reshape(-1, D)
    M = x2.shape[0]

    # Lane-dense output: pad Dout on the WEIGHT side (cheap, one small array)
    # to a multiple of 128 so the output writeback uses unmasked vst.
    # Production code should pre-pad / cache this transform.
    Dout_p = _round_up(Dout, _LANE)
    if Dout_p != Dout:
        w = jnp.pad(w, ((0, 0), (0, Dout_p - Dout)))
        bias = jnp.pad(bias, ((0, Dout_p - Dout),))
    bias2 = bias.reshape(1, Dout_p)

    # Row tile = multiple of the sublane packing.  NO padding of x: the grid
    # uses cdiv and Pallas handles the partial last block.
    sub = _sublane(x.dtype)
    tm = min(_round_up(block_rows, sub), _round_up(M, sub))
    tn = min(_round_up(block_cols, _LANE), Dout_p)
    grid = (pl.cdiv(M, tm), pl.cdiv(Dout_p, tn))

    mxu_dtype = w.dtype  # normalized activation is cast to the weight dtype

    # Advisory cost with REAL (unpadded) sizes.
    cost = pl.CostEstimate(
        flops=2 * M * D * Dout + 7 * M * D,
        transcendentals=M,  # one rsqrt per row
        bytes_accessed=(x2.size * x2.dtype.itemsize
                        + D * Dout * w.dtype.itemsize
                        + Dout * bias.dtype.itemsize
                        + M * Dout * x.dtype.itemsize))

    # Working-set estimate: double-buffered x / w / bias / out tiles, the
    # normalized-activation scratch, and f32 LN temporaries.
    est = (2 * tm * D * x2.dtype.itemsize
           + 2 * D * tn * w.dtype.itemsize
           + 2 * tn * 4
           + 2 * tm * tn * x.dtype.itemsize
           + tm * D * jnp.dtype(mxu_dtype).itemsize
           + 2 * tm * D * 4)

    out = pl.pallas_call(
        functools.partial(_norm_matmul_kernel, eps=eps),
        out_shape=jax.ShapeDtypeStruct((M, Dout_p), x.dtype),
        grid_spec=pltpu.PrefetchScalarGridSpec(
            num_scalar_prefetch=0,
            grid=grid,
            in_specs=[
                pl.BlockSpec((tm, D), lambda i, j: (i, 0)),   # x rows
                pl.BlockSpec((D, tn), lambda i, j: (0, j)),   # weight N-tile
                pl.BlockSpec((1, tn), lambda i, j: (0, j)),   # bias   N-tile
            ],
            out_specs=pl.BlockSpec((tm, tn), lambda i, j: (i, j)),
            scratch_shapes=[pltpu.VMEM((tm, D), mxu_dtype)],  # cached LN(x)
        ),
        compiler_params=pltpu.CompilerParams(
            dimension_semantics=("parallel", "arbitrary"),
            vmem_limit_bytes=_vmem_limit_bytes(est)),
        cost_estimate=cost,
    )(x2, w, bias2)

    if Dout_p != Dout:
        out = out[:, :Dout]
    return out.reshape(*lead, Dout)


# ----------------- Standalone LayerNorm kernel (generic `fn`) -----------------

def _layernorm_kernel(x_ref, g_ref, b_ref, o_ref, *, eps):
    x = x_ref[...].astype(jnp.float32)
    mean = jnp.mean(x, axis=-1, keepdims=True)
    xc = x - mean
    var = jnp.mean(xc * xc, axis=-1, keepdims=True)
    y = xc * jax.lax.rsqrt(var + eps)
    y = y * g_ref[...].astype(jnp.float32) + b_ref[...].astype(jnp.float32)
    o_ref[...] = y.astype(o_ref.dtype)


def layernorm_pallas(x, gamma, beta, *, eps=1e-5, block_rows=512):
    """x: (..., D); gamma/beta: (D,). Normalizes over the last axis."""
    *lead, D = x.shape
    x2 = x.reshape(-1, D)
    M = x2.shape[0]

    sub = _sublane(x.dtype)
    tm = min(_round_up(block_rows, sub), _round_up(M, sub))
    g2 = gamma.reshape(1, D)
    b2 = beta.reshape(1, D)

    est = 2 * (2 * tm * D * x2.dtype.itemsize) + 4 * D * 4 + 2 * tm * D * 4

    out = pl.pallas_call(
        functools.partial(_layernorm_kernel, eps=eps),
        out_shape=jax.ShapeDtypeStruct((M, D), x.dtype),
        grid_spec=pltpu.PrefetchScalarGridSpec(
            num_scalar_prefetch=0,
            grid=(pl.cdiv(M, tm),),
            in_specs=[
                pl.BlockSpec((tm, D), lambda i: (i, 0)),
                pl.BlockSpec((1, D), lambda i: (0, 0)),
                pl.BlockSpec((1, D), lambda i: (0, 0)),
            ],
            out_specs=pl.BlockSpec((tm, D), lambda i: (i, 0)),
        ),
        compiler_params=pltpu.CompilerParams(
            dimension_semantics=("parallel",),
            vmem_limit_bytes=_vmem_limit_bytes(est)),
    )(x2, g2, b2)
    return out.reshape(*lead, D)


# ---------------------------------- PreNorm -----------------------------------

class LinearPallasFn:
    """Deterministic Linear(dim_in, dim_out) used as the wrapped `fn`."""

    def __init__(self, w, b):
        self.w = w      # (Din, Dout)
        self.b = b      # (Dout,)


class PreNormPallas:
    """PreNorm(dim, fn): y = fn(LayerNorm(x)).

    When `fn` is a LinearPallasFn, gamma/beta are folded into its weight/bias
    once at construction time and the whole thing runs as a single fused
    normalize -> matmul Pallas kernel.
    """

    def __init__(self, dim, fn, eps=1e-5):
        self.dim = dim
        self.fn = fn
        self.eps = eps
        # nn.LayerNorm default init: weight = 1, bias = 0.
        self.gamma = jnp.ones((dim,), jnp.float32)
        self.beta = jnp.zeros((dim,), jnp.float32)
        self._folded = None
        if isinstance(fn, LinearPallasFn):
            self._folded = self._fold(fn.w, fn.b)

    def _fold(self, w, b):
        # (y*gamma + beta) @ W + b == y @ (gamma[:,None]*W) + (beta @ W + b)
        w32 = w.astype(jnp.float32)
        w_folded = (self.gamma[:, None] * w32).astype(w.dtype)
        b_folded = b.astype(jnp.float32) + self.beta @ w32
        return w_folded, b_folded

    def __call__(self, x, **kwargs):
        if self._folded is not None and not kwargs:
            w_f, b_f = self._folded
            return prenorm_linear_pallas(x, w_f, b_f, eps=self.eps)
        # Generic fallback: standalone LN kernel, then the arbitrary callable.
        return self.fn(
            layernorm_pallas(x, self.gamma, self.beta, eps=self.eps), **kwargs)


# ------------------------------------ main -------------------------------------

if __name__ == "__main__":
    B, N, D = 2, 8, 32
    key = jax.random.PRNGKey(0)
    kx, kw, kb = jax.random.split(key, 3)

    x = jax.random.normal(kx, (B, N, D), jnp.float32)
    w = jax.random.normal(kw, (D, D), jnp.float32) * 0.02
    b = jax.random.normal(kb, (D,), jnp.float32) * 0.01

    # Pure-JAX reference LayerNorm (eps=1e-5, gamma=1, beta=0).
    mean = jnp.mean(x, axis=-1, keepdims=True)
    var = jnp.mean((x - mean) ** 2, axis=-1, keepdims=True)
    xn = (x - mean) * jax.lax.rsqrt(var + 1e-5)

    # (1) Fused LN + Linear, f32 weights (full-precision MXU).
    prenorm = PreNormPallas(D, LinearPallasFn(w, b))
    y = jax.block_until_ready(prenorm(x))
    y_ref = xn @ w + b
    assert y.shape == (B, N, D)
    assert jnp.allclose(y, y_ref, atol=1e-4, rtol=1e-4), (
        float(jnp.max(jnp.abs(y - y_ref))))

    # (2) Fused LN + Linear, bf16 weights -> bf16 x bf16 MXU, f32 accumulate.
    w16 = w.astype(jnp.bfloat16)
    prenorm16 = PreNormPallas(D, LinearPallasFn(w16, b))
    y16 = jax.block_until_ready(prenorm16(x))
    y16_ref = jnp.dot(xn.astype(jnp.bfloat16), w16,
                      preferred_element_type=jnp.float32) + b
    assert jnp.allclose(y16, y16_ref, atol=1e-2, rtol=1e-2), (
        float(jnp.max(jnp.abs(y16 - y16_ref))))

    # (3) Generic (un-fused) path: arbitrary fn = GELU.
    prenorm_gen = PreNormPallas(D, lambda z: jax.nn.gelu(z))
    y2 = jax.block_until_ready(prenorm_gen(x))
    y2_ref = jax.nn.gelu(xn)
    assert jnp.allclose(y2, y2_ref, atol=1e-4, rtol=1e-4), (
        float(jnp.max(jnp.abs(y2 - y2_ref))))

    print("KERNEL_OK")
</pallas_src>

<mosaic_0001>
module attributes {stable_mosaic.version = 11 : i64} {
  func.func @_norm_matmul_kernel(%arg0: i32, %arg1: i32, %arg2: memref<16x32xf32, #tpu.memory_space<vmem>>, %arg3: memref<32x128xf32, #tpu.memory_space<vmem>>, %arg4: memref<1x128xf32, #tpu.memory_space<vmem>>, %arg5: memref<16x128xf32, #tpu.memory_space<vmem>>, %arg6: memref<16x32xf32, #tpu.memory_space<vmem>>) attributes {dimension_semantics = [#tpu.dimension_semantics<parallel>, #tpu.dimension_semantics<arbitrary>], iteration_bounds = array<i64: 1, 1>, scalar_prefetch = 0 : i64, scratch_operands = 1 : i64, tpu.core_type = #tpu.core_type<tc>, window_params = [{transform_indices = @transform_0, window_bounds = array<i64: 16, 32>}, {transform_indices = @transform_1, window_bounds = array<i64: 32, 128>}, {transform_indices = @transform_2, window_bounds = array<i64: 1, 128>}, {transform_indices = @transform_3, window_bounds = array<i64: 16, 128>}]} {
    %c0_i32 = arith.constant 0 : i32
    %0 = arith.cmpi eq, %arg1, %c0_i32 : i32
    %1 = arith.extui %0 : i1 to i32
    %c0_i32_0 = arith.constant 0 : i32
    %2 = arith.cmpi ne, %1, %c0_i32_0 : i32
    scf.if %2 {
      %c0_8 = arith.constant 0 : index
      %c0_9 = arith.constant 0 : index
      %10 = vector.load %arg2[%c0_8, %c0_9] : memref<16x32xf32, #tpu.memory_space<vmem>>, vector<16x32xf32>
      %cst_10 = arith.constant dense<0.000000e+00> : vector<16xf32>
      %11 = vector.multi_reduction <add>, %10, %cst_10 [1] : vector<16x32xf32> to vector<16xf32>
      %12 = vector.shape_cast %11 : vector<16xf32> to vector<16x1xf32>
      %cst_11 = arith.constant 3.200000e+01 : f32
      %13 = vector.broadcast %cst_11 : f32 to vector<16x1xf32>
      %14 = arith.divf %12, %13 : vector<16x1xf32>
      %15 = vector.broadcast %14 : vector<16x1xf32> to vector<16x32xf32>
      %16 = arith.subf %10, %15 : vector<16x32xf32>
      %17 = arith.mulf %16, %16 : vector<16x32xf32>
      %cst_12 = arith.constant dense<0.000000e+00> : vector<16xf32>
      %18 = vector.multi_reduction <add>, %17, %cst_12 [1] : vector<16x32xf32> to vector<16xf32>
      %19 = vector.shape_cast %18 : vector<16xf32> to vector<16x1xf32>
      %cst_13 = arith.constant 3.200000e+01 : f32
      %20 = vector.broadcast %cst_13 : f32 to vector<16x1xf32>
      %21 = arith.divf %19, %20 : vector<16x1xf32>
      %cst_14 = arith.constant 9.99999974E-6 : f32
      %22 = vector.broadcast %cst_14 : f32 to vector<16x1xf32>
      %23 = arith.addf %21, %22 : vector<16x1xf32>
      %24 = math.rsqrt %23 : vector<16x1xf32>
      %25 = vector.broadcast %24 : vector<16x1xf32> to vector<16x32xf32>
      %26 = arith.mulf %16, %25 : vector<16x32xf32>
      %c0_15 = arith.constant 0 : index
      %c0_16 = arith.constant 0 : index
      %27 = vector.load %arg6[%c0_15, %c0_16] : memref<16x32xf32, #tpu.memory_space<vmem>>, vector<16x32xf32>
      tpu.vector_store %arg6[%c0_15, %c0_16], %26 {strides = array<i32>} : memref<16x32xf32, #tpu.memory_space<vmem>>, vector<16x32xf32>,
    } else {
    }
    %c0 = arith.constant 0 : index
    %c0_1 = arith.constant 0 : index
    %3 = vector.load %arg6[%c0, %c0_1] : memref<16x32xf32, #tpu.memory_space<vmem>>, vector<16x32xf32>
    %c0_2 = arith.constant 0 : index
    %c0_3 = arith.constant 0 : index
    %4 = vector.load %arg3[%c0_2, %c0_3] : memref<32x128xf32, #tpu.memory_space<vmem>>, vector<32x128xf32>
    %cst = arith.constant dense<0.000000e+00> : vector<16x128xf32>
    %5 = tpu.matmul %3, %4, %cst {dimension_numbers = #tpu.dot_dimension_numbers<[1], [0], [0], [1], [0, 0, 1, 1], [], []>} : vector<16x32xf32>, vector<32x128xf32>, vector<16x128xf32> -> vector<16x128xf32>
    %c0_4 = arith.constant 0 : index
    %c0_5 = arith.constant 0 : index
    %6 = vector.load %arg4[%c0_4, %c0_5] : memref<1x128xf32, #tpu.memory_space<vmem>>, vector<1x128xf32>
    %7 = vector.broadcast %6 : vector<1x128xf32> to vector<16x128xf32>
    %8 = arith.addf %5, %7 : vector<16x128xf32>
    %c0_6 = arith.constant 0 : index
    %c0_7 = arith.constant 0 : index
    %9 = vector.load %arg5[%c0_6, %c0_7] : memref<16x128xf32, #tpu.memory_space<vmem>>, vector<16x128xf32>
    tpu.vector_store %arg5[%c0_6, %c0_7], %8 {strides = array<i32>} : memref<16x128xf32, #tpu.memory_space<vmem>>, vector<16x128xf32>,
    return
  }
  func.func @transform_0(%arg0: i32, %arg1: i32) -> (i32, i32) {
    %c0_i32 = arith.constant 0 : i32
    %c0_i32_0 = arith.constant 0 : i32
    return %arg0, %c0_i32 : i32, i32
  }
  func.func @transform_1(%arg0: i32, %arg1: i32) -> (i32, i32) {
    %c0_i32 = arith.constant 0 : i32
    %c0_i32_0 = arith.constant 0 : i32
    return %c0_i32, %arg1 : i32, i32
  }
  func.func @transform_2(%arg0: i32, %arg1: i32) -> (i32, i32) {
    %c0_i32 = arith.constant 0 : i32
    %c0_i32_0 = arith.constant 0 : i32
    return %c0_i32, %arg1 : i32, i32
  }
  func.func @transform_3(%arg0: i32, %arg1: i32) -> (i32, i32) {
    %c0_i32 = arith.constant 0 : i32
    return %arg0, %arg1 : i32, i32
  }
}

</mosaic_0001>

<llo_original>
// kernel: tpu_custom_call.1
$region0: #{tpu_custom_call.1}
  #allocation0 [shape = 'u32[]', space=smem, size = 0x4, offset = 0x4, fixed_abs, tag = 'smem constant byte address 0x4 - core index']
  #allocation1 [shape = 'u32[144,128]{1,0:T(1,128)}', space=vmem, size = 0x12000, scoped, tag = 'internal scratch']
  #allocation2 [shape = 'f32[16,32]{1,0:T(8,128)}', space=vmem, size = 0x2000, scoped, tag = 'scratch operand']
  %s0 = inlined_call_operand.hbm [shape: f32[16,32], index: 0, kind: input, shape index: {}]
  %s1 = inlined_call_operand.hbm [shape: f32[32,128], index: 1, kind: input, shape index: {}]
  %s2 = inlined_call_operand.vmem [shape: f32[1,128], index: 2, kind: input, shape index: {}]
  %s3 = inlined_call_operand.hbm [shape: f32[16,128], index: 3, kind: output, shape index: {}]
  %s4 = sld [smem:[#allocation0]]
  $region34: #{tpu_custom_call.1} parent=0
    _
  %s6 = ssub.s32 1, %s4
  %s7 = scalar_select 0, %s6, %s4
  $region1: #{tpu_custom_call.1} parent=0
    #allocation3 [shape = 'u8[8192]{0}', space=vmem, size = 0x2000, scoped, tag = 'input window, operand 0, single buffered']
    #allocation4 [shape = 's32[1]{0}', space=sflag, size = 0x4, scoped, tag = 'scoped memory for tpu_custom_call.1']
    #allocation5 [shape = 's32[1]{0}', space=sflag, size = 0x4, scoped, tag = 'scoped memory for tpu_custom_call.1']
    #allocation6 [shape = 'u8[16384]{0}', space=vmem, size = 0x4000, scoped, tag = 'input window, operand 1, single buffered']
    #allocation7 [shape = 's32[1]{0}', space=sflag, size = 0x4, scoped, tag = 'scoped memory for tpu_custom_call.1']
    #allocation8 [shape = 'u8[8192]{0}', space=vmem, size = 0x2000, scoped, tag = 'output window, operand 0, single buffered']
    %8 = vsyncpa [#allocation4], 0
    %9 = vsyncpa [#allocation7], 0
    %10 = vsyncpa [#allocation5], 0
    // Predicated region
    $region2: #{tpu_custom_call.1} parent=1 // pred_check
      _
    $region3: #{tpu_custom_call.1} parent=1 // pred_check_branch
      %12 = sbr.rel (0) target = $region5
    $region4: #{tpu_custom_call.1} parent=1 // pred_region
      %s14 = ssub.s32 256, 256
      %15 = vsyncadd [#allocation4], %s14
      %s16 = sshll.u32 [#allocation3], 4
      %s17 = int_to_ptr.vmem [resolvable:$true] %s16
      %22 = dma.hbm_to_vmem [thread:$0]  %s0, 256, %s17, [#allocation4], 128, 128, 8
    $region5: #{tpu_custom_call.1} parent=1 // pred_fallthru
      _
    // Predicated region
    $region6: #{tpu_custom_call.1} parent=1 // pred_check
      _
    $region7: #{tpu_custom_call.1} parent=1 // pred_check_branch
      %24 = sbr.rel (0) target = $region9
    $region8: #{tpu_custom_call.1} parent=1 // pred_region
      %s26 = ssub.s32 512, 512
      %27 = vsyncadd [#allocation7], %s26
      %s28 = sshll.u32 [#allocation6], 4
      %s29 = int_to_ptr.vmem [resolvable:$true] %s28
      %34 = dma.hbm_to_vmem [thread:$0]  %s1, 512, %s29, [#allocation7], 128, 128, 8
    $region9: #{tpu_custom_call.1} parent=1 // pred_fallthru
      _
    // Predicated region
    $region10: #{tpu_custom_call.1} parent=1 // pred_check
      _
    $region11: #{tpu_custom_call.1} parent=1 // pred_check_branch
      %36 = sbr.rel (0) target = $region13
    $region12: #{tpu_custom_call.1} parent=1 // pred_region
      _
    $region13: #{tpu_custom_call.1} parent=1 // pred_fallthru
      _
    // Predicated region
    $region14: #{tpu_custom_call.1} parent=1 // pred_check
      _
    $region15: #{tpu_custom_call.1} parent=1 // pred_check_branch
      %38 = sbr.rel (0) target = $region17
    $region16: #{tpu_custom_call.1} parent=1 // pred_region
      %39 = dma.done [#allocation4], 256
    $region17: #{tpu_custom_call.1} parent=1 // pred_fallthru
      _
    // Predicated region
    $region18: #{tpu_custom_call.1} parent=1 // pred_check
      _
    $region19: #{tpu_custom_call.1} parent=1 // pred_check_branch
      %41 = sbr.rel (0) target = $region21
    $region20: #{tpu_custom_call.1} parent=1 // pred_region
      %42 = dma.done [#allocation7], 512
    $region21: #{tpu_custom_call.1} parent=1 // pred_fallthru
      _
    %p43 = scmp.eq.s32.totalorder 0, 0
    // Predicated region
    $region22: #{tpu_custom_call.1} parent=1 // pred_check
      %p44 = pneg %p43
    $region23: #{tpu_custom_call.1} parent=1 // pred_check_branch
      %46 = sbr.rel (%p44) target = $region25
    $region24: #{tpu_custom_call.1} parent=1 // pred_region
      %v47 = vld [vmem:[#allocation3] sm:$0xff]
      %v48 = vld [vmem:[#allocation3 + $0x8] sm:$0xff]
      %vm49 = vcmask 261120
      %v50 = vsel %vm49, %v47, 0.0
      %51 = vadd.xlane.f32.xlu0 %v50
      %v52 = vpop.xlane.xlu0 %51
      %v53 = vsel %vm49, %v48, 0.0
      %54 = vadd.xlane.f32.xlu0 %v53
      %v55 = vpop.xlane.xlu0 %54
      %v56 = vrcp.pop 32.0
      %v57 = vmul.f32 %v52, %v56
      %v58 = vmul.f32 %v55, %v56
      %v59 = vsub.f32 %v47, %v57
      %v60 = vsub.f32 %v48, %v58
      %v61 = vmul.f32 %v59, %v59
      %v62 = vmul.f32 %v60, %v60
      %v63 = vsel %vm49, %v61, 0.0
      %64 = vadd.xlane.f32.xlu0 %v63
      %v65 = vpop.xlane.xlu0 %64
      %v66 = vsel %vm49, %v62, 0.0
      %67 = vadd.xlane.f32.xlu0 %v66
      %v68 = vpop.xlane.xlu0 %67
      %v69 = vmul.f32 %v65, %v56
      %v70 = vmul.f32 %v68, %v56
      %v71 = vadd.f32 %v69, 1e-05
      %v72 = vadd.f32 %v70, 1e-05
      %v73 = vrsqrt.pop %v71
      %v74 = vrsqrt.pop %v72
      %v75 = vmul.f32 %v59, %v73
      %v76 = vmul.f32 %v60, %v74
      %77 = vst.msk [vmem:[#allocation2] sm:$0xff] %vm49, %v75
      %78 = vst.msk [vmem:[#allocation2 + $0x8] sm:$0xff] %vm49, %v76
    $region25: #{tpu_custom_call.1} parent=1 // pred_fallthru
      _
    %v79 = vld [vmem:[#allocation2] sm:$0xff]
    %v80 = vld [vmem:[#allocation2 + $0x8] sm:$0xff]
    %v81 = vld [vmem:[#allocation6] sm:$0xff]
    %v82 = vld [vmem:[#allocation6 + $0x8] sm:$0xff]
    %v83 = vld [vmem:[#allocation6 + $0x10] sm:$0xff]
    %v84 = vld [vmem:[#allocation6 + $0x18] sm:$0xff]
    %v85 = vld [vmem:[%s2] sm:$0x1]
    %v87 = vlaneseq
    %v88 = vshrl.u32 %v87, 7
    %v89 = vsub.s32 0, %v88
    %v90 = vrot.slane %v85, %v89
    %vm92 = vcmask 261120
    %v94 = vsel %vm92, %v79, 0
    %v97 = vsel %vm92, %v80, 0
    %99 = vmatprep.subr.mxu0 0.0
    %100 = vmatpush1.msra.mxu0 0.0
    %101 = vmatprep.subr.mxu0 0.0
    %102 = vmatpush1.msra.mxu0 0.0
    %103 = vmatprep.subr.mxu0 0.0
    %104 = vmatpush1.msra.mxu0 0.0
    %105 = vmatprep.subr.mxu0 0.0
    %106 = vmatpush1.msra.mxu0 0.0
    %107 = vmatprep.subr.mxu0 0.0
    %108 = vmatpush1.msra.mxu0 0.0
    %109 = vmatprep.subr.mxu0 0.0
    %110 = vmatpush1.msra.mxu0 0.0
    %111 = vmatprep.subr.mxu0 0.0
    %112 = vmatpush1.msra.mxu0 0.0
    %113 = vmatprep.subr.mxu0 0.0
    %114 = vmatpush1.msra.mxu0 0.0
    %115 = vmatprep.subr.mxu0 0.0
    %116 = vmatpush1.msra.mxu0 0.0
    %117 = vmatprep.subr.mxu0 0.0
    %118 = vmatpush1.msra.mxu0 0.0
    %119 = vmatprep.subr.mxu0 0.0
    %120 = vmatpush1.msra.mxu0 0.0
    %121 = vmatprep.subr.mxu0 0.0
    %122 = vmatpush1.msra.mxu0 0.0
    %123 = vmatprep.subr.mxu0 0.0
    %124 = vmatpush1.msra.mxu0 %v84
    %125 = vmatprep.subr.mxu0 0.0
    %126 = vmatpush1.msra.mxu0 %v83
    %127 = vmatprep.subr.mxu0 0.0
    %128 = vmatpush1.msra.mxu0 %v82
    %129 = vmatprep.subr.mxu0 0.0
    %130 = vmatpush1.msra.mxu0 %v81
    %131 = vmatprep.subr.mxu0 0.0
    %132 = vmatpush2.msra.mxu0 0.0
    %133 = vmatprep.subr.mxu0 0.0
    %134 = vmatpush2.msra.mxu0 0.0
    %135 = vmatprep.subr.mxu0 0.0
    %136 = vmatpush2.msra.mxu0 0.0
    %137 = vmatprep.subr.mxu0 0.0
    %138 = vmatpush2.msra.mxu0 0.0
    %139 = vmatprep.subr.mxu0 0.0
    %140 = vmatpush2.msra.mxu0 0.0
    %141 = vmatprep.subr.mxu0 0.0
    %142 = vmatpush2.msra.mxu0 0.0
    %143 = vmatprep.subr.mxu0 0.0
    %144 = vmatpush2.msra.mxu0 0.0
    %145 = vmatprep.subr.mxu0 0.0
    %146 = vmatpush2.msra.mxu0 0.0
    %147 = vmatprep.subr.mxu0 0.0
    %148 = vmatpush2.msra.mxu0 0.0
    %149 = vmatprep.subr.mxu0 0.0
    %150 = vmatpush2.msra.mxu0 0.0
    %151 = vmatprep.subr.mxu0 0.0
    %152 = vmatpush2.msra.mxu0 0.0
    %153 = vmatprep.subr.mxu0 0.0
    %154 = vmatpush2.msra.mxu0 0.0
    %155 = vmatprep.subr.mxu0 0.0
    %156 = vmatpush2.msra.mxu0 0.0
    %157 = vmatprep.subr.mxu0 0.0
    %158 = vmatpush2.msra.mxu0 0.0
    %159 = vmatprep.subr.mxu0 0.0
    %160 = vmatpush2.msra.mxu0 0.0
    %161 = vmatprep.subr.mxu0 0.0
    %162 = vmatpush2.msra.mxu0 0.0
    %163 = vmatprep.mubr.f32.mxu0 0.0
    %164 = vmatmul.mubr.f32.gmra.mxu0 %v94
    %v165 = vpop.f32.mrf.mxu0
    %v166 = vadd.f32 %v90, %v165
    %v167 = vpop.f32.mrf.mxu0
    %168 = vmatprep.mubr.f32.mxu0 0.0
    %169 = vmatmul.mubr.f32.gmra.mxu0 %v97
    %v170 = vpop.f32.mrf.mxu0
    %v171 = vadd.f32 %v90, %v170
    %v172 = vpop.f32.mrf.mxu0
    %173 = vdwg.mxu0
    %174 = vst [vmem:[#allocation8] sm:$0xff] %v166
    %175 = vst [vmem:[#allocation8 + $0x8] sm:$0xff] %v171
    // Predicated region
    $region26: #{tpu_custom_call.1} parent=1 // pred_check
      _
    $region27: #{tpu_custom_call.1} parent=1 // pred_check_branch
      %177 = sbr.rel (0) target = $region29
    $region28: #{tpu_custom_call.1} parent=1 // pred_region
      %s179 = ssub.s32 256, 256
      %180 = vsyncadd [#allocation5], %s179
      %s181 = sshll.u32 [#allocation8], 4
      %s182 = int_to_ptr.vmem [resolvable:$true] %s181
      %187 = dma.vmem_to_hbm [thread:$0]  %s182, 256, %s3, [#allocation5], 128, 128, 8
    $region29: #{tpu_custom_call.1} parent=1 // pred_fallthru
      _
    // Predicated region
    $region30: #{tpu_custom_call.1} parent=1 // pred_check
      _
    $region31: #{tpu_custom_call.1} parent=1 // pred_check_branch
      %189 = sbr.rel (0) target = $region33
    $region32: #{tpu_custom_call.1} parent=1 // pred_region
      %190 = dma.done [#allocation5], 256
    $region33: #{tpu_custom_call.1} parent=1 // pred_fallthru
      _
    %191 = vsyncpa [#allocation4], 1
    %192 = vsyncpa [#allocation7], 1
    %193 = vsyncpa [#allocation5], 1

</llo_original>
